<compile_context>
chip_gen: v6e
topology: v6e:2x2x1
jax: 0.10.0
libtpu: 0.0.40
codegen_flags: <defaults>
</compile_context>

<pallas_src>
import functools

import jax
import jax.numpy as jnp
from jax import lax
from jax.experimental import pallas as pl
from jax.experimental.pallas import tpu as pltpu

# Well under v7x's 64 MiB physical VMEM (actual demand is single-digit MiB at
# ViT scale); also lifts v5e's 16 MiB scoped default.
_VMEM_LIMIT = 48 * 1024 * 1024
# Contractions up to this K are done whole per tile (no K grid axis / scratch).
_K_COLLAPSE = 2048
# Default q/kv sequence block: 256 fills the 256x256 MXU on v6e/v7x.
# TODO(synk): on v5e (4x128x128 MXU, 1 vst slot) prefer block_seq=128.
_SEQ_BLOCK = 256


def _round_up(x, m):
    return ((x + m - 1) // m) * m


def _pick_block(dim, preferred, align):
    """Largest block <= preferred that divides `dim` and is a multiple of
    `align`; falls back to the full dim (full-extent blocks are always legal)."""
    if dim <= preferred:
        return dim
    t = (preferred // align) * align
    while t >= align:
        if dim % t == 0:
            return t
        t -= align
    return dim


# ---------------------------------------------------------------------------
# Tiled matmul (+ optional bias).  K <= _K_COLLAPSE: whole contraction per tile.
# ---------------------------------------------------------------------------
def _mm_kernel(x_ref, w_ref, o_ref):
    o_ref[...] = jnp.dot(x_ref[...], w_ref[...],
                         preferred_element_type=jnp.float32).astype(o_ref.dtype)


def _mm_bias_kernel(x_ref, w_ref, b_ref, o_ref):
    acc = jnp.dot(x_ref[...], w_ref[...], preferred_element_type=jnp.float32)
    o_ref[...] = (acc + b_ref[...].astype(jnp.float32)).astype(o_ref.dtype)


def _mm_acc_kernel(x_ref, w_ref, o_ref, acc_ref):
    k = pl.program_id(2)

    @pl.when(k == 0)
    def _():
        acc_ref[...] = jnp.zeros_like(acc_ref)

    acc_ref[...] += jnp.dot(x_ref[...], w_ref[...],
                            preferred_element_type=jnp.float32)

    @pl.when(k == pl.num_programs(2) - 1)
    def _():
        o_ref[...] = acc_ref[...].astype(o_ref.dtype)


def _mm_acc_bias_kernel(x_ref, w_ref, b_ref, o_ref, acc_ref):
    k = pl.program_id(2)

    @pl.when(k == 0)
    def _():
        acc_ref[...] = jnp.zeros_like(acc_ref)

    acc_ref[...] += jnp.dot(x_ref[...], w_ref[...],
                            preferred_element_type=jnp.float32)

    @pl.when(k == pl.num_programs(2) - 1)
    def _():
        o_ref[...] = (acc_ref[...] + b_ref[...].astype(jnp.float32)
                      ).astype(o_ref.dtype)


def pallas_matmul(x, w, b=None, *, tm=256, tn=512):
    """o = x @ w (+ b); x:(M,K), w:(K,N), b:(N,) -> (M,N). f32 accumulation."""
    M, K = x.shape
    K2, N = w.shape
    assert K == K2

    bm = _pick_block(M, tm, 16)     # sublane-dim: 16-aligned (bf16-safe)
    bn = _pick_block(N, tn, 128)    # lane-dim: 128-aligned or full
    bias2d = None if b is None else b.reshape(1, N)

    if K <= _K_COLLAPSE:
        # No K grid axis, no accumulator scratch, no init/finalize branches.
        in_specs = [pl.BlockSpec((bm, K), lambda i, j: (i, 0)),
                    pl.BlockSpec((K, bn), lambda i, j: (0, j))]
        args = [x, w]
        kernel = _mm_kernel
        if bias2d is not None:
            in_specs.append(pl.BlockSpec((1, bn), lambda i, j: (0, j)))
            args.append(bias2d)
            kernel = _mm_bias_kernel
        return pl.pallas_call(
            kernel,
            out_shape=jax.ShapeDtypeStruct((M, N), x.dtype),
            grid=(M // bm, N // bn),
            in_specs=in_specs,
            out_specs=pl.BlockSpec((bm, bn), lambda i, j: (i, j)),
            compiler_params=pltpu.CompilerParams(
                dimension_semantics=("parallel", "parallel"),
                vmem_limit_bytes=_VMEM_LIMIT),
        )(*args)

    # Fallback: K-accumulated path for very large contractions.
    bk = _pick_block(K, _K_COLLAPSE, 128)
    in_specs = [pl.BlockSpec((bm, bk), lambda i, j, k: (i, k)),
                pl.BlockSpec((bk, bn), lambda i, j, k: (k, j))]
    args = [x, w]
    kernel = _mm_acc_kernel
    if bias2d is not None:
        in_specs.append(pl.BlockSpec((1, bn), lambda i, j, k: (0, j)))
        args.append(bias2d)
        kernel = _mm_acc_bias_kernel
    return pl.pallas_call(
        kernel,
        out_shape=jax.ShapeDtypeStruct((M, N), x.dtype),
        grid=(M // bm, N // bn, K // bk),
        in_specs=in_specs,
        out_specs=pl.BlockSpec((bm, bn), lambda i, j, k: (i, j)),
        scratch_shapes=[pltpu.VMEM((bm, bn), jnp.float32)],
        compiler_params=pltpu.CompilerParams(
            dimension_semantics=("parallel", "parallel", "arbitrary"),
            vmem_limit_bytes=_VMEM_LIMIT),
    )(*args)


# ---------------------------------------------------------------------------
# Flash attention (online softmax), heads via fori_loop, lane-dense output
# ---------------------------------------------------------------------------
def _flash_attn_kernel(q_ref, k_ref, v_ref, o_ref, m_ref, l_ref, acc_ref,
                       *, num_heads, head_dim, seq_len, block_kv, needs_mask):
    # q_ref/k_ref/v_ref: (1, 1, H, blk, Dh) dense blocks
    # o_ref:             (1, bq, H*Dh)  — resident across the kv axis
    # scratch: m/l (H, bq, 1) f32, acc (H, bq, Dh) f32
    ki = pl.program_id(2)

    @pl.when(ki == 0)
    def _init():
        m_ref[...] = jnp.full_like(m_ref, -jnp.inf)
        l_ref[...] = jnp.zeros_like(l_ref)
        acc_ref[...] = jnp.zeros_like(acc_ref)

    def per_head(h, carry):
        q = q_ref[0, 0, h]              # (bq, Dh); scale folded into W_q
        k = k_ref[0, 0, h]              # (bkv, Dh)
        v = v_ref[0, 0, h]              # (bkv, Dh)

        # q @ k^T without an in-kernel transpose: contract last dims.
        s = lax.dot_general(q, k, (((1,), (1,)), ((), ())),
                            preferred_element_type=jnp.float32)   # (bq, bkv)
        if needs_mask:
            kpos = ki * block_kv + lax.broadcasted_iota(jnp.int32, s.shape, 1)
            s = jnp.where(kpos < seq_len, s, -1e30)

        m_prev = m_ref[h]                                          # (bq, 1)
        m_new = jnp.maximum(m_prev, jnp.max(s, axis=-1, keepdims=True))
        alpha = jnp.exp(m_prev - m_new)
        p = jnp.exp(s - m_new)
        l_ref[h] = alpha * l_ref[h] + jnp.sum(p, axis=-1, keepdims=True)
        acc_ref[h] = alpha * acc_ref[h] + jnp.dot(
            p.astype(v.dtype), v, preferred_element_type=jnp.float32)
        m_ref[h] = m_new
        return carry

    # Heads iterated (not statically unrolled): only one head's working set
    # is live at a time -> bounded vreg pressure, no spill traffic.
    lax.fori_loop(0, num_heads, per_head, 0, unroll=False)

    @pl.when(ki == pl.num_programs(2) - 1)
    def _finalize():
        # Assemble the lane-dense (bq, C) output block with static column
        # slices; the HBM writeback happens once per q block, unmasked.
        for h in range(num_heads):
            inv_l = pl.reciprocal(l_ref[h], approx=False)
            o_ref[0, :, h * head_dim:(h + 1) * head_dim] = (
                acc_ref[h] * inv_l).astype(o_ref.dtype)


def pallas_flash_attention(qkv_heads, seq_len, *, block_seq=_SEQ_BLOCK):
    """qkv_heads: (3, B, H, Npad, Dh). Returns (B, Npad, H*Dh), head-merged."""
    _, B, H, Npad, Dh = qkv_heads.shape
    blk = min(block_seq, Npad)
    assert Npad % blk == 0
    nq = nkv = Npad // blk
    needs_mask = seq_len < Npad

    kernel = functools.partial(
        _flash_attn_kernel, num_heads=H, head_dim=Dh, seq_len=seq_len,
        block_kv=blk, needs_mask=needs_mask)

    q_spec = pl.BlockSpec((1, 1, H, blk, Dh), lambda b, qi, ki: (0, b, 0, qi, 0))
    k_spec = pl.BlockSpec((1, 1, H, blk, Dh), lambda b, qi, ki: (1, b, 0, ki, 0))
    v_spec = pl.BlockSpec((1, 1, H, blk, Dh), lambda b, qi, ki: (2, b, 0, ki, 0))
    o_spec = pl.BlockSpec((1, blk, H * Dh), lambda b, qi, ki: (b, qi, 0))

    return pl.pallas_call(
        kernel,
        out_shape=jax.ShapeDtypeStruct((B, Npad, H * Dh), qkv_heads.dtype),
        grid=(B, nq, nkv),                       # kv innermost (reduction)
        in_specs=[q_spec, k_spec, v_spec],
        out_specs=o_spec,
        scratch_shapes=[
            pltpu.VMEM((H, blk, 1), jnp.float32),    # running max
            pltpu.VMEM((H, blk, 1), jnp.float32),    # running sum
            pltpu.VMEM((H, blk, Dh), jnp.float32),   # per-head output acc
        ],
        compiler_params=pltpu.CompilerParams(
            dimension_semantics=("parallel", "parallel", "arbitrary"),
            vmem_limit_bytes=_VMEM_LIMIT),
    )(qkv_heads, qkv_heads, qkv_heads)


# ---------------------------------------------------------------------------
# Full Attention.forward
# ---------------------------------------------------------------------------
def attention_forward(x, w_qkv, w_proj, b_proj, num_heads, *, block_seq=_SEQ_BLOCK):
    """Pallas forward of ViT Attention (qkv_bias=False, qk_norm=Identity, p=0)."""
    B, N, C = x.shape
    H = num_heads
    Dh = C // H
    scale = Dh ** (-0.5)

    # Fold the softmax scale into the Q columns of the QKV weight (f32 math):
    # zero cost in the hot path, removes per-kv-step q*scale multiplies.
    w_q = (w_qkv[:, :C].astype(jnp.float32) * scale).astype(w_qkv.dtype)
    w_qkv_s = jnp.concatenate([w_q, w_qkv[:, C:]], axis=1)

    # Pad the sequence so it tiles into 16-aligned blocks; padded keys are
    # masked inside the kernel and padded rows are sliced off at the end.
    blk = min(block_seq, _round_up(N, 16))
    Npad = _round_up(N, blk)
    if Npad != N:
        x = jnp.pad(x, ((0, 0), (0, Npad - N), (0, 0)))

    # (1) QKV projection: lane-dense (B*Npad, 3C) output, full-K tiles.
    qkv = pallas_matmul(x.reshape(B * Npad, C), w_qkv_s)

    # (2) One relayout pass -> dense per-head (seq, Dh) blocks for attention.
    qkv_heads = qkv.reshape(B, Npad, 3, H, Dh).transpose(2, 0, 3, 1, 4)

    # (3) Flash attention; output head-merged and lane-dense: (B, Npad, C).
    out = pallas_flash_attention(qkv_heads, N, block_seq=blk)

    # (4) Output projection with bias.
    out = pallas_matmul(out.reshape(B * Npad, C), w_proj, b_proj)
    out = out.reshape(B, Npad, C)
    return out[:, :N, :] if Npad != N else out


# ---------------------------------------------------------------------------
# Reference (plain JAX)
# ---------------------------------------------------------------------------
def attention_reference(x, w_qkv, w_proj, b_proj, num_heads):
    B, N, C = x.shape
    H = num_heads
    Dh = C // H
    scale = Dh ** (-0.5)
    qkv = (x.reshape(B * N, C) @ w_qkv).reshape(B, N, 3, H, Dh).transpose(2, 0, 3, 1, 4)
    q, k, v = qkv[0], qkv[1], qkv[2]
    s = jnp.einsum("bhqd,bhkd->bhqk", q * scale, k)
    p = jax.nn.softmax(s, axis=-1)
    o = jnp.einsum("bhqk,bhkd->bhqd", p, v)
    o = o.transpose(0, 2, 1, 3).reshape(B, N, C)
    return (o.reshape(B * N, C) @ w_proj + b_proj).reshape(B, N, C)


# ---------------------------------------------------------------------------
if __name__ == "__main__":
    key = jax.random.PRNGKey(0)

    def make_inputs(B, N, C):
        kx, kqkv, kproj, kb = jax.random.split(key, 4)
        x = jax.random.normal(kx, (B, N, C), dtype=jnp.float32)
        # nn.Linear stores (out, in); we keep the transposed (in, out) layout
        # so the kernels compute x @ W directly.
        w_qkv = jax.random.normal(kqkv, (C, 3 * C), dtype=jnp.float32) * 0.05
        w_proj = jax.random.normal(kproj, (C, C), dtype=jnp.float32) * 0.05
        b_proj = jax.random.normal(kb, (C,), dtype=jnp.float32) * 0.01
        return x, w_qkv, w_proj, b_proj

    # --- small shape, f32 (exercises seq padding 8 -> 16 and key masking) ----
    B, N, C, H = 2, 8, 32, 4
    x, w_qkv, w_proj, b_proj = make_inputs(B, N, C)
    ref = attention_reference(x, w_qkv, w_proj, b_proj, H)
    out = jax.block_until_ready(attention_forward(x, w_qkv, w_proj, b_proj, H))
    assert out.shape == (B, N, C)
    assert jnp.allclose(out, ref, atol=2e-4, rtol=2e-4), "f32 mismatch vs reference"

    # --- bf16-fed MXU path (f32 accumulation in-kernel), loose tolerance -----
    out_bf16 = jax.block_until_ready(attention_forward(
        x.astype(jnp.bfloat16), w_qkv.astype(jnp.bfloat16),
        w_proj.astype(jnp.bfloat16), b_proj.astype(jnp.bfloat16), H))
    assert jnp.allclose(out_bf16.astype(jnp.float32), ref, atol=2e-2, rtol=2e-2), \
        "bf16 mismatch vs reference"

    # --- multi-block kv streaming + partially padded last kv block -----------
    B2, N2, C2, H2 = 1, 40, 64, 4
    x2, w_qkv2, w_proj2, b_proj2 = make_inputs(B2, N2, C2)
    ref2 = attention_reference(x2, w_qkv2, w_proj2, b_proj2, H2)
    out2 = jax.block_until_ready(
        attention_forward(x2, w_qkv2, w_proj2, b_proj2, H2, block_seq=16))
    assert out2.shape == (B2, N2, C2)
    assert jnp.allclose(out2, ref2, atol=2e-4, rtol=2e-4), "multi-block mismatch"

    print("KERNEL_OK")
</pallas_src>

<mosaic_0001>
module attributes {stable_mosaic.version = 11 : i64} {
  func.func @_mm_kernel(%arg0: i32, %arg1: i32, %arg2: memref<32x32xf32, #tpu.memory_space<vmem>>, %arg3: memref<32x96xf32, #tpu.memory_space<vmem>>, %arg4: memref<32x96xf32, #tpu.memory_space<vmem>>) attributes {dimension_semantics = [#tpu.dimension_semantics<parallel>, #tpu.dimension_semantics<parallel>], iteration_bounds = array<i64: 1, 1>, scalar_prefetch = 0 : i64, scratch_operands = 0 : i64, tpu.core_type = #tpu.core_type<tc>, window_params = [{transform_indices = @transform_0, window_bounds = array<i64: 32, 32>}, {transform_indices = @transform_1, window_bounds = array<i64: 32, 96>}, {transform_indices = @transform_2, window_bounds = array<i64: 32, 96>}]} {
    %c0 = arith.constant 0 : index
    %c0_0 = arith.constant 0 : index
    %0 = vector.load %arg2[%c0, %c0_0] : memref<32x32xf32, #tpu.memory_space<vmem>>, vector<32x32xf32>
    %c0_1 = arith.constant 0 : index
    %c0_2 = arith.constant 0 : index
    %1 = vector.load %arg3[%c0_1, %c0_2] : memref<32x96xf32, #tpu.memory_space<vmem>>, vector<32x96xf32>
    %cst = arith.constant dense<0.000000e+00> : vector<32x96xf32>
    %2 = tpu.matmul %0, %1, %cst {dimension_numbers = #tpu.dot_dimension_numbers<[1], [0], [0], [1], [0, 0, 1, 1], [], []>} : vector<32x32xf32>, vector<32x96xf32>, vector<32x96xf32> -> vector<32x96xf32>
    %c0_3 = arith.constant 0 : index
    %c0_4 = arith.constant 0 : index
    %3 = vector.load %arg4[%c0_3, %c0_4] : memref<32x96xf32, #tpu.memory_space<vmem>>, vector<32x96xf32>
    tpu.vector_store %arg4[%c0_3, %c0_4], %2 {strides = array<i32>} : memref<32x96xf32, #tpu.memory_space<vmem>>, vector<32x96xf32>,
    return
  }
  func.func @transform_0(%arg0: i32, %arg1: i32) -> (i32, i32) {
    %c0_i32 = arith.constant 0 : i32
    %c0_i32_0 = arith.constant 0 : i32
    return %arg0, %c0_i32 : i32, i32
  }
  func.func @transform_1(%arg0: i32, %arg1: i32) -> (i32, i32) {
    %c0_i32 = arith.constant 0 : i32
    %c0_i32_0 = arith.constant 0 : i32
    return %c0_i32, %arg1 : i32, i32
  }
  func.func @transform_2(%arg0: i32, %arg1: i32) -> (i32, i32) {
    %c0_i32 = arith.constant 0 : i32
    return %arg0, %arg1 : i32, i32
  }
}

</mosaic_0001>

<llo_original>
// kernel: tpu_custom_call.1
$region0: #{tpu_custom_call.1}
  #allocation0 [shape = 'u32[]', space=smem, size = 0x4, offset = 0x4, fixed_abs, tag = 'smem constant byte address 0x4 - core index']
  #allocation1 [shape = 'u32[144,128]{1,0:T(1,128)}', space=vmem, size = 0x12000, scoped, tag = 'internal scratch']
  %s0 = inlined_call_operand.hbm [shape: f32[32,32], index: 0, kind: input, shape index: {}]
  %s1 = inlined_call_operand.hbm [shape: f32[32,96], index: 1, kind: input, shape index: {}]
  %s2 = inlined_call_operand.hbm [shape: f32[32,96], index: 2, kind: output, shape index: {}]
  %s3 = sld [smem:[#allocation0]]
  $region26: #{tpu_custom_call.1} parent=0
    _
  %s5 = ssub.s32 1, %s3
  %s6 = scalar_select 0, %s5, %s3
  $region1: #{tpu_custom_call.1} parent=0
    #allocation2 [shape = 'u8[16384]{0}', space=vmem, size = 0x4000, scoped, tag = 'input window, operand 0, single buffered']
    #allocation3 [shape = 's32[1]{0}', space=sflag, size = 0x4, scoped, tag = 'scoped memory for tpu_custom_call.1']
    #allocation4 [shape = 's32[1]{0}', space=sflag, size = 0x4, scoped, tag = 'scoped memory for tpu_custom_call.1']
    #allocation5 [shape = 'u8[16384]{0}', space=vmem, size = 0x4000, scoped, tag = 'input window, operand 1, single buffered']
    #allocation6 [shape = 's32[1]{0}', space=sflag, size = 0x4, scoped, tag = 'scoped memory for tpu_custom_call.1']
    #allocation7 [shape = 'u8[16384]{0}', space=vmem, size = 0x4000, scoped, tag = 'output window, operand 0, single buffered']
    %7 = vsyncpa [#allocation3], 0
    %8 = vsyncpa [#allocation6], 0
    %9 = vsyncpa [#allocation4], 0
    // Predicated region
    $region2: #{tpu_custom_call.1} parent=1 // pred_check
      _
    $region3: #{tpu_custom_call.1} parent=1 // pred_check_branch
      %11 = sbr.rel (0) target = $region5
    $region4: #{tpu_custom_call.1} parent=1 // pred_region
      %s13 = ssub.s32 512, 512
      %14 = vsyncadd [#allocation3], %s13
      %s15 = sshll.u32 [#allocation2], 4
      %s16 = int_to_ptr.vmem [resolvable:$true] %s15
      %21 = dma.hbm_to_vmem [thread:$0]  %s0, 512, %s16, [#allocation3], 128, 128, 8
    $region5: #{tpu_custom_call.1} parent=1 // pred_fallthru
      _
    // Predicated region
    $region6: #{tpu_custom_call.1} parent=1 // pred_check
      _
    $region7: #{tpu_custom_call.1} parent=1 // pred_check_branch
      %23 = sbr.rel (0) target = $region9
    $region8: #{tpu_custom_call.1} parent=1 // pred_region
      %s25 = ssub.s32 512, 512
      %26 = vsyncadd [#allocation6], %s25
      %s27 = sshll.u32 [#allocation5], 4
      %s28 = int_to_ptr.vmem [resolvable:$true] %s27
      %33 = dma.hbm_to_vmem [thread:$0]  %s1, 512, %s28, [#allocation6], 128, 128, 8
    $region9: #{tpu_custom_call.1} parent=1 // pred_fallthru
      _
    // Predicated region
    $region10: #{tpu_custom_call.1} parent=1 // pred_check
      _
    $region11: #{tpu_custom_call.1} parent=1 // pred_check_branch
      %35 = sbr.rel (0) target = $region13
    $region12: #{tpu_custom_call.1} parent=1 // pred_region
      %36 = dma.done [#allocation3], 512
    $region13: #{tpu_custom_call.1} parent=1 // pred_fallthru
      _
    // Predicated region
    $region14: #{tpu_custom_call.1} parent=1 // pred_check
      _
    $region15: #{tpu_custom_call.1} parent=1 // pred_check_branch
      %38 = sbr.rel (0) target = $region17
    $region16: #{tpu_custom_call.1} parent=1 // pred_region
      %39 = dma.done [#allocation6], 512
    $region17: #{tpu_custom_call.1} parent=1 // pred_fallthru
      _
    %v40 = vld [vmem:[#allocation2] sm:$0xff]
    %v41 = vld [vmem:[#allocation2 + $0x8] sm:$0xff]
    %v42 = vld [vmem:[#allocation2 + $0x10] sm:$0xff]
    %v43 = vld [vmem:[#allocation2 + $0x18] sm:$0xff]
    %v44 = vld [vmem:[#allocation5] sm:$0xff]
    %v45 = vld [vmem:[#allocation5 + $0x8] sm:$0xff]
    %v46 = vld [vmem:[#allocation5 + $0x10] sm:$0xff]
    %v47 = vld [vmem:[#allocation5 + $0x18] sm:$0xff]
    %vm48 = vcmask 261120
    %v50 = vsel %vm48, %v40, 0
    %v53 = vsel %vm48, %v41, 0
    %v56 = vsel %vm48, %v42, 0
    %v59 = vsel %vm48, %v43, 0
    %61 = vmatprep.subr.mxu0 0.0
    %62 = vmatpush1.msra.mxu0 0.0
    %63 = vmatprep.subr.mxu0 0.0
    %64 = vmatpush1.msra.mxu0 0.0
    %65 = vmatprep.subr.mxu0 0.0
    %66 = vmatpush1.msra.mxu0 0.0
    %67 = vmatprep.subr.mxu0 0.0
    %68 = vmatpush1.msra.mxu0 0.0
    %69 = vmatprep.subr.mxu0 0.0
    %70 = vmatpush1.msra.mxu0 0.0
    %71 = vmatprep.subr.mxu0 0.0
    %72 = vmatpush1.msra.mxu0 0.0
    %73 = vmatprep.subr.mxu0 0.0
    %74 = vmatpush1.msra.mxu0 0.0
    %75 = vmatprep.subr.mxu0 0.0
    %76 = vmatpush1.msra.mxu0 0.0
    %77 = vmatprep.subr.mxu0 0.0
    %78 = vmatpush1.msra.mxu0 0.0
    %79 = vmatprep.subr.mxu0 0.0
    %80 = vmatpush1.msra.mxu0 0.0
    %81 = vmatprep.subr.mxu0 0.0
    %82 = vmatpush1.msra.mxu0 0.0
    %83 = vmatprep.subr.mxu0 0.0
    %84 = vmatpush1.msra.mxu0 0.0
    %85 = vmatprep.subr.mxu0 0.0
    %86 = vmatpush1.msra.mxu0 %v47
    %87 = vmatprep.subr.mxu0 0.0
    %88 = vmatpush1.msra.mxu0 %v46
    %89 = vmatprep.subr.mxu0 0.0
    %90 = vmatpush1.msra.mxu0 %v45
    %91 = vmatprep.subr.mxu0 0.0
    %92 = vmatpush1.msra.mxu0 %v44
    %93 = vmatprep.subr.mxu0 0.0
    %94 = vmatpush2.msra.mxu0 0.0
    %95 = vmatprep.subr.mxu0 0.0
    %96 = vmatpush2.msra.mxu0 0.0
    %97 = vmatprep.subr.mxu0 0.0
    %98 = vmatpush2.msra.mxu0 0.0
    %99 = vmatprep.subr.mxu0 0.0
    %100 = vmatpush2.msra.mxu0 0.0
    %101 = vmatprep.subr.mxu0 0.0
    %102 = vmatpush2.msra.mxu0 0.0
    %103 = vmatprep.subr.mxu0 0.0
    %104 = vmatpush2.msra.mxu0 0.0
    %105 = vmatprep.subr.mxu0 0.0
    %106 = vmatpush2.msra.mxu0 0.0
    %107 = vmatprep.subr.mxu0 0.0
    %108 = vmatpush2.msra.mxu0 0.0
    %109 = vmatprep.subr.mxu0 0.0
    %110 = vmatpush2.msra.mxu0 0.0
    %111 = vmatprep.subr.mxu0 0.0
    %112 = vmatpush2.msra.mxu0 0.0
    %113 = vmatprep.subr.mxu0 0.0
    %114 = vmatpush2.msra.mxu0 0.0
    %115 = vmatprep.subr.mxu0 0.0
    %116 = vmatpush2.msra.mxu0 0.0
    %117 = vmatprep.subr.mxu0 0.0
    %118 = vmatpush2.msra.mxu0 0.0
    %119 = vmatprep.subr.mxu0 0.0
    %120 = vmatpush2.msra.mxu0 0.0
    %121 = vmatprep.subr.mxu0 0.0
    %122 = vmatpush2.msra.mxu0 0.0
    %123 = vmatprep.subr.mxu0 0.0
    %124 = vmatpush2.msra.mxu0 0.0
    %125 = vmatprep.mubr.f32.mxu0 0.0
    %126 = vmatmul.mubr.f32.gmra.mxu0 %v50
    %v127 = vpop.f32.mrf.mxu0
    %v128 = vadd.f32 0.0, %v127
    %v129 = vpop.f32.mrf.mxu0
    %130 = vmatprep.mubr.f32.mxu0 0.0
    %131 = vmatmul.mubr.f32.gmra.mxu0 %v53
    %v132 = vpop.f32.mrf.mxu0
    %v133 = vadd.f32 0.0, %v132
    %v134 = vpop.f32.mrf.mxu0
    %135 = vmatprep.mubr.f32.mxu0 0.0
    %136 = vmatmul.mubr.f32.gmra.mxu0 %v56
    %v137 = vpop.f32.mrf.mxu0
    %v138 = vadd.f32 0.0, %v137
    %v139 = vpop.f32.mrf.mxu0
    %140 = vmatprep.mubr.f32.mxu0 0.0
    %141 = vmatmul.mubr.f32.gmra.mxu0 %v59
    %v142 = vpop.f32.mrf.mxu0
    %v143 = vadd.f32 0.0, %v142
    %v144 = vpop.f32.mrf.mxu0
    %145 = vdwg.mxu0
    %vm146 = vcmask 785408
    %147 = vst.msk [vmem:[#allocation7] sm:$0xff] %vm146, %v128
    %148 = vst.msk [vmem:[#allocation7 + $0x8] sm:$0xff] %vm146, %v133
    %149 = vst.msk [vmem:[#allocation7 + $0x10] sm:$0xff] %vm146, %v138
    %150 = vst.msk [vmem:[#allocation7 + $0x18] sm:$0xff] %vm146, %v143
    // Predicated region
    $region18: #{tpu_custom_call.1} parent=1 // pred_check
      _
    $region19: #{tpu_custom_call.1} parent=1 // pred_check_branch
      %152 = sbr.rel (0) target = $region21
    $region20: #{tpu_custom_call.1} parent=1 // pred_region
      %s154 = ssub.s32 512, 512
      %155 = vsyncadd [#allocation4], %s154
      %s156 = sshll.u32 [#allocation7], 4
      %s157 = int_to_ptr.vmem [resolvable:$true] %s156
      %162 = dma.vmem_to_hbm [thread:$0]  %s157, 512, %s2, [#allocation4], 128, 128, 8
    $region21: #{tpu_custom_call.1} parent=1 // pred_fallthru
      _
    // Predicated region
    $region22: #{tpu_custom_call.1} parent=1 // pred_check
      _
    $region23: #{tpu_custom_call.1} parent=1 // pred_check_branch
      %164 = sbr.rel (0) target = $region25
    $region24: #{tpu_custom_call.1} parent=1 // pred_region
      %165 = dma.done [#allocation4], 512
    $region25: #{tpu_custom_call.1} parent=1 // pred_fallthru
      _
    %166 = vsyncpa [#allocation3], 1
    %167 = vsyncpa [#allocation6], 1
    %168 = vsyncpa [#allocation4], 1

</llo_original>
